<compile_context>
chip_gen: v7x
topology: tpu7x:2x2x1
jax: 0.10.0
libtpu: 0.0.40
codegen_flags: <defaults>
</compile_context>

<pallas_src>
import functools

import jax
import jax.numpy as jnp
from jax.experimental import pallas as pl
from jax.experimental.pallas import tpu as pltpu


def _round_up(x, m):
    return ((x + m - 1) // m) * m


def _conv_relu_kernel(xa_ref, xb_ref, w_ref, o_ref, *, TR, H_halo, Wp, KH, KW):
    """One (batch, row-tile) grid step.

    xa_ref: (1, Cin_p, TR)      main window of flattened padded rows (lanes)
    xb_ref: (1, Cin_p, H_halo)  halo columns immediately following the window
    w_ref:  (Cout_p, K)         fused im2col weights, K = KH*KW*Cin_p
    o_ref:  (1, Cout_p, TR)     lane-dense output tile
    """
    TRh = TR + H_halo

    # Stitch main + halo into one (Cin_p, TRh) window. The concat offset (TR)
    # is a multiple of 128 lanes, so this is vreg-aligned and cheap.
    xwin = jnp.concatenate([xa_ref[0], xb_ref[0]], axis=1)

    # Build the (K, TR) im2col patch from the 9 taps. Each tap is a constant
    # lane shift of the same flat window: pltpu.roll (XLU slot) followed by an
    # aligned [:, :TR] slice -- no strided-slice + reshape relayout copies.
    taps = []
    for dh in range(KH):
        for dw in range(KW):
            ofs = dh * Wp + dw
            if ofs == 0:
                shifted = xwin
            else:
                # roll by (TRh - ofs): shifted[:, j] == xwin[:, j + ofs] for j < TR
                shifted = pltpu.roll(xwin, shift=TRh - ofs, axis=1)
            taps.append(shifted[:, :TR])
    patch = jnp.concatenate(taps, axis=0)            # (KH*KW*Cin_p, TR)

    # Single fused MXU matmul (M=Cout_p, K=KH*KW*Cin_p, N=TR), f32 accumulate,
    # then ReLU + cast once on the result.
    acc = jnp.dot(w_ref[...], patch, preferred_element_type=jnp.float32)
    o_ref[0, :, :] = jnp.maximum(acc, 0.0).astype(o_ref.dtype)


def conv_relu_block(x_nchw, weight_oihw, *, row_tile_target=1024):
    """Forward of ConvReLUBlock.  x: (N, Cin, H, W), weight: (Cout, Cin, KH, KW).

    Assumes stride=1 and 'same' padding (pad = kernel_size // 2), i.e. the
    PyTorch module defaults.
    """
    N, Cin, H, W = x_nchw.shape
    Cout, Cin_w, KH, KW = weight_oihw.shape
    assert Cin == Cin_w
    ph, pw = KH // 2, KW // 2
    Hp, Wp = H + 2 * ph, W + 2 * pw

    Cin_p = _round_up(Cin, 8)        # sublane-aligned input channels
    Cout_p = _round_up(Cout, 8)      # sublane-aligned output channels
    K = KH * KW * Cin_p              # fused im2col contraction depth

    # --- flat-row geometry -------------------------------------------------
    # Output flat position q = r*Wp + c (valid for c < W) reads input flat
    # positions q + dh*Wp + dw  =>  halo of (KH-1)*Wp + (KW-1) extra columns.
    Q = H * Wp                                        # flat output positions
    halo = (KH - 1) * Wp + (KW - 1) + 1
    H_halo = _round_up(halo, 128)                     # lane-aligned halo block
    k_blocks = min(-(-Q // H_halo), max(1, row_tile_target // H_halo))
    TR = k_blocks * H_halo                            # rows per grid step (x128)
    n_tiles = -(-Q // TR)
    R_total = n_tiles * TR + H_halo                   # padded flat-row length

    # --- wrapper glue: stays channels-first (no transposes), pads only ------
    x_pad = jnp.pad(x_nchw, ((0, 0), (0, Cin_p - Cin), (ph, ph), (pw, pw)))
    x_flat = x_pad.reshape(N, Cin_p, Hp * Wp)
    x_flat = jnp.pad(x_flat, ((0, 0), (0, 0), (0, R_total - Hp * Wp)))

    # Fused im2col weights: (Cout,Cin,KH,KW) -> (Cout_p, KH*KW*Cin_p), with the
    # K index ordered (tap-major, channel-minor) to match the patch build.
    w_p = jnp.pad(weight_oihw, ((0, Cout_p - Cout), (0, Cin_p - Cin),
                                (0, 0), (0, 0)))
    w_mat = jnp.transpose(w_p, (0, 2, 3, 1)).reshape(Cout_p, K)
    w_mat = w_mat.astype(x_nchw.dtype)

    kernel = functools.partial(_conv_relu_kernel, TR=TR, H_halo=H_halo,
                               Wp=Wp, KH=KH, KW=KW)

    out_flat = pl.pallas_call(
        kernel,
        out_shape=jax.ShapeDtypeStruct((N, Cout_p, n_tiles * TR), x_nchw.dtype),
        grid_spec=pltpu.PrefetchScalarGridSpec(
            num_scalar_prefetch=0,
            grid=(N, n_tiles),
            in_specs=[
                # main window: flat columns [t*TR, (t+1)*TR)
                pl.BlockSpec((1, Cin_p, TR), lambda n, t: (n, 0, t)),
                # halo window: flat columns [(t+1)*TR, (t+1)*TR + H_halo);
                # valid block index because TR = k_blocks * H_halo.
                pl.BlockSpec((1, Cin_p, H_halo),
                             lambda n, t: (n, 0, (t + 1) * k_blocks)),
                # fused weights: constant index map -> resident, single DMA
                pl.BlockSpec((Cout_p, K), lambda n, t: (0, 0)),
            ],
            out_specs=pl.BlockSpec((1, Cout_p, TR), lambda n, t: (n, 0, t)),
        ),
        compiler_params=pltpu.CompilerParams(
            dimension_semantics=("parallel", "parallel"),
            vmem_limit_bytes=32 * 1024 * 1024),
    )(x_flat, x_flat, w_mat)

    # Valid outputs: channel co < Cout, flat column q = r*Wp + c with c < W.
    out = out_flat[:, :Cout, :Q].reshape(N, Cout, H, Wp)[:, :, :, :W]
    return out   # already NCHW


if __name__ == "__main__":
    key = jax.random.PRNGKey(0)
    kx, kw = jax.random.split(key)

    # Small shapes consistent with the module (configurable in/out channels).
    N, Cin, H, W = 2, 4, 16, 16
    Cout, KH, KW = 4, 3, 3

    x = jax.random.normal(kx, (N, Cin, H, W), dtype=jnp.float32)

    # Deterministic init mimicking nn.Conv2d default (kaiming-uniform-ish bound).
    fan_in = Cin * KH * KW
    bound = 1.0 / float(fan_in) ** 0.5
    weight = jax.random.uniform(kw, (Cout, Cin, KH, KW), jnp.float32,
                                minval=-bound, maxval=bound)

    out = jax.block_until_ready(conv_relu_block(x, weight))

    # Reference check against XLA conv (same semantics as nn.Conv2d + ReLU).
    ref = jax.lax.conv_general_dilated(
        x, weight, window_strides=(1, 1), padding=((1, 1), (1, 1)),
        dimension_numbers=("NCHW", "OIHW", "NCHW"))
    ref = jnp.maximum(ref, 0.0)
    assert out.shape == (N, Cout, H, W)
    assert jnp.allclose(out, ref, atol=1e-4, rtol=1e-4), \
        float(jnp.max(jnp.abs(out - ref)))

    print("KERNEL_OK")
</pallas_src>

<mosaic_0001>
module attributes {stable_mosaic.version = 11 : i64} {
  func.func @_conv_relu_kernel(%arg0: i32, %arg1: i32, %arg2: memref<1x8x384xf32, #tpu.memory_space<vmem>>, %arg3: memref<1x8x128xf32, #tpu.memory_space<vmem>>, %arg4: memref<8x72xf32, #tpu.memory_space<vmem>>, %arg5: memref<1x8x384xf32, #tpu.memory_space<vmem>>) attributes {dimension_semantics = [#tpu.dimension_semantics<parallel>, #tpu.dimension_semantics<parallel>], iteration_bounds = array<i64: 2, 1>, scalar_prefetch = 0 : i64, scratch_operands = 0 : i64, tpu.core_type = #tpu.core_type<tc>, window_params = [{transform_indices = @transform_0, window_bounds = array<i64: 1, 8, 384>}, {transform_indices = @transform_1, window_bounds = array<i64: 1, 8, 128>}, {pipeline_mode = #tpu.pipeline_mode<synchronous>, transform_indices = @transform_2, window_bounds = array<i64: 8, 72>}, {transform_indices = @transform_3, window_bounds = array<i64: 1, 8, 384>}]} {
    %c0 = arith.constant 0 : index
    %c0_0 = arith.constant 0 : index
    %c0_1 = arith.constant 0 : index
    %0 = vector.load %arg2[%c0, %c0_0, %c0_1] : memref<1x8x384xf32, #tpu.memory_space<vmem>>, vector<1x8x384xf32>
    %1 = vector.shape_cast %0 : vector<1x8x384xf32> to vector<8x384xf32>
    %c0_2 = arith.constant 0 : index
    %c0_3 = arith.constant 0 : index
    %c0_4 = arith.constant 0 : index
    %2 = vector.load %arg3[%c0_2, %c0_3, %c0_4] : memref<1x8x128xf32, #tpu.memory_space<vmem>>, vector<1x8x128xf32>
    %3 = vector.shape_cast %2 : vector<1x8x128xf32> to vector<8x128xf32>
    %4 = tpu.concatenate %1, %3 in 1 : vector<8x384xf32>, vector<8x128xf32> -> vector<8x512xf32>
    %5 = vector.extract_strided_slice %4 {offsets = [0, 0], sizes = [8, 384], strides = [1, 1]} : vector<8x512xf32> to vector<8x384xf32>
    %c511_i32 = arith.constant 511 : i32
    %6 = tpu.dynamic_rotate %4 by %c511_i32 dim 1 : vector<8x512xf32>, i32 -> vector<8x512xf32>
    %7 = vector.extract_strided_slice %6 {offsets = [0, 0], sizes = [8, 384], strides = [1, 1]} : vector<8x512xf32> to vector<8x384xf32>
    %c510_i32 = arith.constant 510 : i32
    %8 = tpu.dynamic_rotate %4 by %c510_i32 dim 1 : vector<8x512xf32>, i32 -> vector<8x512xf32>
    %9 = vector.extract_strided_slice %8 {offsets = [0, 0], sizes = [8, 384], strides = [1, 1]} : vector<8x512xf32> to vector<8x384xf32>
    %c494_i32 = arith.constant 494 : i32
    %10 = tpu.dynamic_rotate %4 by %c494_i32 dim 1 : vector<8x512xf32>, i32 -> vector<8x512xf32>
    %11 = vector.extract_strided_slice %10 {offsets = [0, 0], sizes = [8, 384], strides = [1, 1]} : vector<8x512xf32> to vector<8x384xf32>
    %c493_i32 = arith.constant 493 : i32
    %12 = tpu.dynamic_rotate %4 by %c493_i32 dim 1 : vector<8x512xf32>, i32 -> vector<8x512xf32>
    %13 = vector.extract_strided_slice %12 {offsets = [0, 0], sizes = [8, 384], strides = [1, 1]} : vector<8x512xf32> to vector<8x384xf32>
    %c492_i32 = arith.constant 492 : i32
    %14 = tpu.dynamic_rotate %4 by %c492_i32 dim 1 : vector<8x512xf32>, i32 -> vector<8x512xf32>
    %15 = vector.extract_strided_slice %14 {offsets = [0, 0], sizes = [8, 384], strides = [1, 1]} : vector<8x512xf32> to vector<8x384xf32>
    %c476_i32 = arith.constant 476 : i32
    %16 = tpu.dynamic_rotate %4 by %c476_i32 dim 1 : vector<8x512xf32>, i32 -> vector<8x512xf32>
    %17 = vector.extract_strided_slice %16 {offsets = [0, 0], sizes = [8, 384], strides = [1, 1]} : vector<8x512xf32> to vector<8x384xf32>
    %c475_i32 = arith.constant 475 : i32
    %18 = tpu.dynamic_rotate %4 by %c475_i32 dim 1 : vector<8x512xf32>, i32 -> vector<8x512xf32>
    %19 = vector.extract_strided_slice %18 {offsets = [0, 0], sizes = [8, 384], strides = [1, 1]} : vector<8x512xf32> to vector<8x384xf32>
    %c474_i32 = arith.constant 474 : i32
    %20 = tpu.dynamic_rotate %4 by %c474_i32 dim 1 : vector<8x512xf32>, i32 -> vector<8x512xf32>
    %21 = vector.extract_strided_slice %20 {offsets = [0, 0], sizes = [8, 384], strides = [1, 1]} : vector<8x512xf32> to vector<8x384xf32>
    %22 = tpu.concatenate %5, %7, %9, %11, %13, %15, %17, %19, %21 in 0 : vector<8x384xf32>, vector<8x384xf32>, vector<8x384xf32>, vector<8x384xf32>, vector<8x384xf32>, vector<8x384xf32>, vector<8x384xf32>, vector<8x384xf32>, vector<8x384xf32> -> vector<72x384xf32>
    %c0_5 = arith.constant 0 : index
    %c0_6 = arith.constant 0 : index
    %23 = vector.load %arg4[%c0_5, %c0_6] : memref<8x72xf32, #tpu.memory_space<vmem>>, vector<8x72xf32>
    %cst = arith.constant dense<0.000000e+00> : vector<8x384xf32>
    %24 = tpu.matmul %23, %22, %cst {dimension_numbers = #tpu.dot_dimension_numbers<[1], [0], [0], [1], [0, 0, 1, 1], [], []>} : vector<8x72xf32>, vector<72x384xf32>, vector<8x384xf32> -> vector<8x384xf32>
    %cst_7 = arith.constant 0.000000e+00 : f32
    %25 = vector.broadcast %cst_7 : f32 to vector<8x384xf32>
    %26 = arith.maximumf %24, %25 : vector<8x384xf32>
    %c0_8 = arith.constant 0 : index
    %c0_9 = arith.constant 0 : index
    %c0_10 = arith.constant 0 : index
    %27 = vector.load %arg5[%c0_8, %c0_9, %c0_10] : memref<1x8x384xf32, #tpu.memory_space<vmem>>, vector<1x8x384xf32>
    %28 = vector.shape_cast %27 : vector<1x8x384xf32> to vector<8x384xf32>
    %29 = vector.shape_cast %26 : vector<8x384xf32> to vector<1x8x384xf32>
    tpu.vector_store %arg5[%c0_8, %c0_9, %c0_10], %29 {strides = array<i32>} : memref<1x8x384xf32, #tpu.memory_space<vmem>>, vector<1x8x384xf32>,
    return
  }
  func.func @transform_0(%arg0: i32, %arg1: i32) -> (i32, i32, i32) {
    %c0_i32 = arith.constant 0 : i32
    %c0_i32_0 = arith.constant 0 : i32
    return %arg0, %c0_i32, %arg1 : i32, i32, i32
  }
  func.func @transform_1(%arg0: i32, %arg1: i32) -> (i32, i32, i32) {
    %c1_i32 = arith.constant 1 : i32
    %0 = arith.addi %arg1, %c1_i32 : i32
    %c3_i32 = arith.constant 3 : i32
    %1 = arith.muli %0, %c3_i32 : i32
    %c0_i32 = arith.constant 0 : i32
    %c0_i32_0 = arith.constant 0 : i32
    return %arg0, %c0_i32, %1 : i32, i32, i32
  }
  func.func @transform_2(%arg0: i32, %arg1: i32) -> (i32, i32) {
    %c0_i32 = arith.constant 0 : i32
    %c0_i32_0 = arith.constant 0 : i32
    %c0_i32_1 = arith.constant 0 : i32
    return %c0_i32, %c0_i32_0 : i32, i32
  }
  func.func @transform_3(%arg0: i32, %arg1: i32) -> (i32, i32, i32) {
    %c0_i32 = arith.constant 0 : i32
    %c0_i32_0 = arith.constant 0 : i32
    return %arg0, %c0_i32, %arg1 : i32, i32, i32
  }
}

</mosaic_0001>

<llo_original>
// kernel: tpu_custom_call.1
$region0: #{tpu_custom_call.1}
  #allocation0 [shape = 'u32[]', space=smem, size = 0x4, offset = 0x4, fixed_abs, tag = 'smem constant byte address 0x4 - core index']
  #allocation1 [shape = 'u32[144,128]{1,0:T(1,128)}', space=vmem, size = 0x12000, scoped, tag = 'internal scratch']
  %s0 = inlined_call_operand.hbm [shape: f32[2,8,512], index: 0, kind: input, shape index: {}]
  %s1 = inlined_call_operand.hbm [shape: f32[2,8,512], index: 1, kind: input, shape index: {}]
  %s2 = inlined_call_operand.hbm [shape: f32[8,72], index: 2, kind: input, shape index: {}]
  %s3 = inlined_call_operand.hbm [shape: f32[2,8,384], index: 3, kind: output, shape index: {}]
  %s4 = sld [smem:[#allocation0]]
  $region57: #{tpu_custom_call.1} parent=0
    _
  %s6 = ssub.s32 1, %s4
  %s7 = scalar_select 0, %s6, %s4
  $region1: #{tpu_custom_call.1} parent=0
    #allocation2 [shape = 'u8[24576]{0}', space=vmem, size = 0x6000, scoped, tag = 'input window, operand 0']
    #allocation3 [shape = 's32[2]{0}', space=sflag, size = 0x8, scoped, tag = 'scoped memory for tpu_custom_call.1']
    #allocation4 [shape = 's32[2]{0}', space=sflag, size = 0x8, scoped, tag = 'scoped memory for tpu_custom_call.1']
    #allocation5 [shape = 'u8[8192]{0}', space=vmem, size = 0x2000, scoped, tag = 'input window, operand 1']
    #allocation6 [shape = 's32[2]{0}', space=sflag, size = 0x8, scoped, tag = 'scoped memory for tpu_custom_call.1']
    #allocation7 [shape = 'u8[4096]{0}', space=vmem, size = 0x1000, scoped, tag = 'input window, operand 2, single buffered']
    #allocation8 [shape = 'u8[24576]{0}', space=vmem, size = 0x6000, scoped, tag = 'output window, operand 0']
    %8 = vsyncpa [#allocation3], 0
    %s9 = scalar_lea.sflag [#allocation3], 1
    %10 = vsyncpa %s9, 0
    %11 = vsyncpa [#allocation6], 0
    %s12 = scalar_lea.sflag [#allocation6], 1
    %13 = vsyncpa %s12, 0
    %14 = vsyncpa [#allocation4], 0
    %s15 = scalar_lea.sflag [#allocation4], 1
    %16 = vsyncpa %s15, 0
    loop: start=0, step=1, limit=4
    $region2: #{tpu_custom_call.1} parent=1 // loop_pre_header
      _
    $region3: #{tpu_custom_call.1} parent=1 // loop_header
      %s18 = sphi 0, %s22
      %p19 = scmp.ge.s32.totalorder %s18, 4
      %s25 = sphi 0, %s37
      %s26 = sphi 0, %s33
      %s27 = sphi 0, %s25
      %s28 = sphi 0, %s26
      %s29 = sphi 0, %s27
      %s30 = sphi 0, %s28
      %s42 = sphi 0, %s44
      %s45 = sphi 0, %s42
      %s46 = sphi 0, %s45
      %s62 = sphi 0, %s46
      %s74 = sphi 0, %s76
      %s77 = sphi 0, %s74
      %s78 = sphi 0, %s77
      %s94 = sphi 0, %s78
      %s98 = sphi 0, %s98
      %s100 = sphi 0, %s98
      %s101 = sphi 0, %s100
      %s115 = sphi 0, %s101
      %s123 = sphi 0, %s125
      %s126 = sphi 0, %s123
      %s127 = sphi 0, %s126
      %s143 = sphi 0, %s127
    $region4: #{tpu_custom_call.1} parent=1 // loop_header_branch
      %21 = sbr.rel (%p19) target = $region8
    $region5: #{tpu_custom_call.1} parent=1 // loop_body
      %s23 = ssub.s32 %s18, 1
      %s24 = ssub.s32 %s18, 2
      %s31 = sadd.s32 1, %s26
      %p32 = scmp.ge.s32.totalorder %s31, 1
      %s33 = scalar_select %p32, 0, %s31
      %s34 = sadd.s32 1, %s25
      %s35 = scalar_select %p32, %s34, %s25
      %p36 = scmp.ge.s32.totalorder %s35, 2
      %s37 = scalar_select %p36, 0, %s35
      %s38 = ssub.s32 %s25, %s37
      %s39 = ssub.s32 %s26, %s33
      %s40 = sor.u32 %s38, %s39
      %p41 = scmp.eq.s32.totalorder %s40, 0
      %s43 = sadd.s32 %s42, 1
      %s44 = scalar_select %p41, %s42, %s43
      %p47 = pneg %p41
      %p48 = scmp.eq.s32.totalorder %s18, 1
      %p49 = por %p47, %p48
      %p50 = scmp.ne.s32.totalorder %s42, %s45
      %p51 = scmp.eq.s32.totalorder %s18, 0
      %p52 = por %p50, %p51
      %p53 = scmp.ne.s32.totalorder %s42, %s45
      %p54 = scmp.eq.s32.totalorder %s23, 1
      %p55 = por %p53, %p54
      %p56 = scmp.ne.s32.totalorder %s45, %s46
      %p57 = scmp.eq.s32.totalorder %s23, 0
      %p58 = por %p56, %p57
      %p59 = scmp.ne.s32.totalorder %s45, %s46
      %p60 = scmp.eq.s32.totalorder %s24, 1
      %p61 = por %p59, %p60
      %p63 = scmp.ne.s32.totalorder %s46, %s62
      %p64 = scmp.eq.s32.totalorder %s24, 0
      %p65 = por %p63, %p64
      %s66 = sadd.s32 %s26, 1
      %s67 = smul.u32 %s66, 3
      %s68 = sadd.s32 %s33, 1
      %s69 = smul.u32 %s68, 3
      %s70 = ssub.s32 %s25, %s37
      %s71 = ssub.s32 %s67, %s69
      %s72 = sor.u32 %s70, %s71
      %p73 = scmp.eq.s32.totalorder %s72, 0
      %s75 = sadd.s32 %s74, 1
      %s76 = scalar_select %p73, %s74, %s75
      %p79 = pneg %p73
      %p80 = scmp.eq.s32.totalorder %s18, 1
      %p81 = por %p79, %p80
      %p82 = scmp.ne.s32.totalorder %s74, %s77
      %p83 = scmp.eq.s32.totalorder %s18, 0
      %p84 = por %p82, %p83
      %p85 = scmp.ne.s32.totalorder %s74, %s77
      %p86 = scmp.eq.s32.totalorder %s23, 1
      %p87 = por %p85, %p86
      %p88 = scmp.ne.s32.totalorder %s77, %s78
      %p89 = scmp.eq.s32.totalorder %s23, 0
      %p90 = por %p88, %p89
      %p91 = scmp.ne.s32.totalorder %s77, %s78
      %p92 = scmp.eq.s32.totalorder %s24, 1
      %p93 = por %p91, %p92
      %p95 = scmp.ne.s32.totalorder %s78, %s94
      %p96 = scmp.eq.s32.totalorder %s24, 0
      %p97 = por %p95, %p96
      %s99 = sadd.s32 %s98, 1
      %p102 = scmp.eq.s32.totalorder %s18, 1
      %p103 = scmp.ne.s32.totalorder %s98, %s100
      %p104 = scmp.eq.s32.totalorder %s18, 0
      %p105 = por %p103, %p104
      %p106 = scmp.ne.s32.totalorder %s98, %s100
      %p107 = scmp.eq.s32.totalorder %s23, 1
      %p108 = por %p106, %p107
      %p109 = scmp.ne.s32.totalorder %s100, %s101
      %p110 = scmp.eq.s32.totalorder %s23, 0
      %p111 = por %p109, %p110
      %p112 = scmp.ne.s32.totalorder %s100, %s101
      %p113 = scmp.eq.s32.totalorder %s24, 1
      %p114 = por %p112, %p113
      %p116 = scmp.ne.s32.totalorder %s101, %s115
      %p117 = scmp.eq.s32.totalorder %s24, 0
      %p118 = por %p116, %p117
      %s119 = ssub.s32 %s25, %s37
      %s120 = ssub.s32 %s26, %s33
      %s121 = sor.u32 %s119, %s120
      %p122 = scmp.eq.s32.totalorder %s121, 0
      %s124 = sadd.s32 %s123, 1
      %s125 = scalar_select %p122, %s123, %s124
      %p128 = pneg %p122
      %p129 = scmp.eq.s32.totalorder %s18, 1
      %p130 = por %p128, %p129
      %p131 = scmp.ne.s32.totalorder %s123, %s126
      %p132 = scmp.eq.s32.totalorder %s18, 0
      %p133 = por %p131, %p132
      %p134 = scmp.ne.s32.totalorder %s123, %s126
      %p135 = scmp.eq.s32.totalorder %s23, 1
      %p136 = por %p134, %p135
      %p137 = scmp.ne.s32.totalorder %s126, %s127
      %p138 = scmp.eq.s32.totalorder %s23, 0
      %p139 = por %p137, %p138
      %p140 = scmp.ne.s32.totalorder %s126, %s127
      %p141 = scmp.eq.s32.totalorder %s24, 1
      %p142 = por %p140, %p141
      %p144 = scmp.ne.s32.totalorder %s127, %s143
      %p145 = scmp.eq.s32.totalorder %s24, 0
      %p146 = por %p144, %p145
      %p147 = scmp.le.s32.totalorder 1, %s18
      %p148 = scmp.lt.s32.totalorder %s18, 3
      %p149 = pnand %p147, %p148
      %p150 = pneg %p149
      // Predicated region
      $region9: #{tpu_custom_call.1} parent=5 // pred_check
        _
      $region10: #{tpu_custom_call.1} parent=5 // pred_check_branch
        %152 = sbr.rel (%p149) target = $region12
      $region11: #{tpu_custom_call.1} parent=5 // pred_region
        %s153 = ssub.s32 %s18, 1
        // Predicated region
        $region13: #{tpu_custom_call.1} parent=11 // pred_check
          %p154 = pneg %p111
        $region14: #{tpu_custom_call.1} parent=11 // pred_check_branch
          %156 = sbr.rel (%p154) target = $region16
        $region15: #{tpu_custom_call.1} parent=11 // pred_region
          %s158 = ssub.s32 128, 128
          %159 = vsyncadd [#allocation6], %s158
          %s161 = sshll.u32 [#allocation7], 4
          %s162 = int_to_ptr.vmem [resolvable:$true] %s161
          %164 = dma.hbm_to_vmem [thread:$0]  %s2, 128, %s162, [#allocation6]
        $region16: #{tpu_custom_call.1} parent=11 // pred_fallthru
          _
      $region12: #{tpu_custom_call.1} parent=5 // pred_fallthru
        _
      %p165 = scmp.lt.s32.totalorder %s18, 2
      // Predicated region
      $region17: #{tpu_custom_call.1} parent=5 // pred_check
        %p166 = pneg %p165
      $region18: #{tpu_custom_call.1} parent=5 // pred_check_branch
        %168 = sbr.rel (%p166) target = $region20
      $region19: #{tpu_custom_call.1} parent=5 // pred_region
        // Predicated region
        $region21: #{tpu_custom_call.1} parent=19 // pred_check
          %p169 = pneg %p52
        $region22: #{tpu_custom_call.1} parent=19 // pred_check_branch
          %171 = sbr.rel (%p169) target = $region24
        $region23: #{tpu_custom_call.1} parent=19 // pred_region
          %s172 = sand.u32 %s42, 1
          %s173 = scalar_lea.sflag [#allocation3], %s172
          %s174 = sand.u32 %s42, 1
          %s175 = smul.addr %s174, 24
          %s176 = scalar_lea.vmem [#allocation2], %s175
          %s177 = smul.u32 3, %s26
          %s178 = ssub.s32 4, %s177
          %p179 = scmp.lt.s32.totalorder %s178, 3
          %s180 = scalar_select %p179, %s178, 3
          %s181 = smul.u32 128, %s180
          %s183 = ssub.s32 384, %s181
          %184 = vsyncadd %s173, %s183
          %p185 = scmp.ne.s32.totalorder 0, %s181
          %s186 = smul.addr %s25, 4
          %s187 = sadd.s32 %s177, %s186
          %s188 = smul.addr %s187, 128
          %s189 = scalar_lea.hbm %s0, %s188
          %s190 = smul.u32 %s180, 8
          %s191 = sshll.u32 %s190, 4
          %s192 = sshll.u32 %s176, 4
          %s193 = int_to_ptr.vmem [resolvable:$true] %s192
          %195 = dma.hbm_to_vmem [thread:$0]  (%p185), %s189, %s191, %s193, %s173
        $region24: #{tpu_custom_call.1} parent=19 // pred_fallthru
          _
        // Predicated region
        $region25: #{tpu_custom_call.1} parent=19 // pred_check
          %p196 = pneg %p84
        $region26: #{tpu_custom_call.1} parent=19 // pred_check_branch
          %198 = sbr.rel (%p196) target = $region28
        $region27: #{tpu_custom_call.1} parent=19 // pred_region
          %s199 = sand.u32 %s18, 1
          %s200 = scalar_lea.sflag [#allocation6], %s199
          %s201 = sand.u32 %s74, 1
          %s202 = smul.addr %s201, 8
          %s203 = scalar_lea.vmem [#allocation5], %s202
          %s204 = sadd.s32 %s26, 1
          %s205 = smul.u32 %s204, 3
          %s207 = ssub.s32 128, 128
          %208 = vsyncadd %s200, %s207
          %s209 = smul.addr %s25, 4
          %s210 = sadd.s32 %s205, %s209
          %s211 = smul.addr %s210, 128
          %s212 = scalar_lea.hbm %s1, %s211
          %s214 = sshll.u32 %s203, 4
          %s215 = int_to_ptr.vmem [resolvable:$true] %s214
          %217 = dma.hbm_to_vmem [thread:$0]  %s212, 128, %s215, %s200
        $region28: #{tpu_custom_call.1} parent=19 // pred_fallthru
          _
      $region20: #{tpu_custom_call.1} parent=5 // pred_fallthru
        _
      %p218 = scmp.le.s32.totalorder 1, %s18
      %p219 = scmp.lt.s32.totalorder %s18, 3
      %p220 = pnand %p218, %p219
      %p221 = pneg %p220
      // Predicated region
      $region29: #{tpu_custom_call.1} parent=5 // pred_check
        _
      $region30: #{tpu_custom_call.1} parent=5 // pred_check_branch
        %223 = sbr.rel (%p220) target = $region32
      $region31: #{tpu_custom_call.1} parent=5 // pred_region
        %s224 = ssub.s32 %s18, 1
        %s225 = sand.u32 %s45, 1
        %s226 = scalar_lea.sflag [#allocation3], %s225
        %s227 = sand.u32 %s45, 1
        %s228 = smul.addr %s227, 24
        %s229 = scalar_lea.vmem [#allocation2], %s228
        // Predicated region
        $region33: #{tpu_custom_call.1} parent=31 // pred_check
          %p230 = pneg %p58
        $region34: #{tpu_custom_call.1} parent=31 // pred_check_branch
          %232 = sbr.rel (%p230) target = $region36
        $region35: #{tpu_custom_call.1} parent=31 // pred_region
          %233 = dma.done %s226, 384
        $region36: #{tpu_custom_call.1} parent=31 // pred_fallthru
          _
        %s234 = sand.u32 %s23, 1
        %s235 = scalar_lea.sflag [#allocation6], %s234
        %s236 = sand.u32 %s77, 1
        %s237 = smul.addr %s236, 8
        %s238 = scalar_lea.vmem [#allocation5], %s237
        // Predicated region
        $region37: #{tpu_custom_call.1} parent=31 // pred_check
          %p239 = pneg %p90
        $region38: #{tpu_custom_call.1} parent=31 // pred_check_branch
          %241 = sbr.rel (%p239) target = $region40
        $region39: #{tpu_custom_call.1} parent=31 // pred_region
          %242 = dma.done %s235, 128
        $region40: #{tpu_custom_call.1} parent=31 // pred_fallthru
          _
        // Predicated region
        $region41: #{tpu_custom_call.1} parent=31 // pred_check
          %p243 = pneg %p111
        $region42: #{tpu_custom_call.1} parent=31 // pred_check_branch
          %245 = sbr.rel (%p243) target = $region44
        $region43: #{tpu_custom_call.1} parent=31 // pred_region
          %246 = dma.done [#allocation6], 128
        $region44: #{tpu_custom_call.1} parent=31 // pred_fallthru
          _
        %s247 = sand.u32 %s45, 1
        %s248 = scalar_lea.sflag [#allocation3], %s247
        %s249 = sand.u32 %s45, 1
        %s250 = smul.addr %s249, 24
        %s251 = scalar_lea.vmem [#allocation2], %s250
        %p252 = pneg %p58
        %p253 = pneg %p55
        %s254 = sand.u32 %s23, 1
        %s255 = scalar_lea.sflag [#allocation6], %s254
        %s256 = sand.u32 %s77, 1
        %s257 = smul.addr %s256, 8
        %s258 = scalar_lea.vmem [#allocation5], %s257
        %p259 = pneg %p90
        %p260 = pneg %p87
        %p261 = pneg %p111
        %p262 = pneg %p108
        %p263 = pneg %p139
        %p264 = pneg %p136
        %s265 = sand.u32 %s126, 1
        %s266 = scalar_lea.sflag [#allocation4], %s265
        %s267 = sand.u32 %s126, 1
        %s268 = smul.addr %s267, 24
        %s269 = scalar_lea.vmem [#allocation8], %s268
        %s270 = smul.u32 3, %s28
        %s271 = ssub.s32 4, %s270
        %p272 = scmp.lt.s32.totalorder %s271, 3
        %s273 = scalar_select %p272, %s271, 3
        %s274 = smul.u32 128, %s273
        %s275 = sadd.s32 %s28, 1
        %s276 = smul.u32 %s275, 3
        %s277 = smul.u32 3, %s28
        %v278 = vld [vmem:[%s229] sm:$0xff]
        %v279 = vld [vmem:[%s229 + $0x8] sm:$0xff]
        %v280 = vld [vmem:[%s229 + $0x10] sm:$0xff]
        %v281 = vld [vmem:[%s238] sm:$0xff]
        %282 = vrot.lane.b32.xlu0 %v278, 127
        %v283 = vpop.permute.xlu0 %282
        %284 = vrot.lane.b32.xlu0 %v279, 127
        %v285 = vpop.permute.xlu0 %284
        %286 = vrot.lane.b32.xlu0 %v280, 127
        %v287 = vpop.permute.xlu0 %286
        %288 = vrot.lane.b32.xlu0 %v281, 127
        %v289 = vpop.permute.xlu0 %288
        %v290 = vlaneseq
        %v291 = vand.u32 %v290, 127
        %vm292 = vcmp.lt.s32.totalorder %v291, 127
        %v293 = vsel %vm292, %v287, %v289
        %v294 = vsel %vm292, %v285, %v287
        %v295 = vsel %vm292, %v283, %v285
        %296 = vrot.lane.b32.xlu0 %v278, 126
        %v297 = vpop.permute.xlu0 %296
        %298 = vrot.lane.b32.xlu0 %v279, 126
        %v299 = vpop.permute.xlu0 %298
        %300 = vrot.lane.b32.xlu0 %v280, 126
        %v301 = vpop.permute.xlu0 %300
        %302 = vrot.lane.b32.xlu0 %v281, 126
        %v303 = vpop.permute.xlu0 %302
        %vm304 = vcmp.lt.s32.totalorder %v291, 126
        %v305 = vsel %vm304, %v301, %v303
        %v306 = vsel %vm304, %v299, %v301
        %v307 = vsel %vm304, %v297, %v299
        %308 = vrot.lane.b32.xlu0 %v278, 110
        %v309 = vpop.permute.xlu0 %308
        %310 = vrot.lane.b32.xlu0 %v279, 110
        %v311 = vpop.permute.xlu0 %310
        %312 = vrot.lane.b32.xlu0 %v280, 110
        %v313 = vpop.permute.xlu0 %312
        %314 = vrot.lane.b32.xlu0 %v281, 110
        %v315 = vpop.permute.xlu0 %314
        %vm316 = vcmp.lt.s32.totalorder %v291, 110
        %v317 = vsel %vm316, %v313, %v315
        %v318 = vsel %vm316, %v311, %v313
        %v319 = vsel %vm316, %v309, %v311
        %320 = vrot.lane.b32.xlu0 %v278, 109
        %v321 = vpop.permute.xlu0 %320
        %322 = vrot.lane.b32.xlu0 %v279, 109
        %v323 = vpop.permute.xlu0 %322
        %324 = vrot.lane.b32.xlu0 %v280, 109
        %v325 = vpop.permute.xlu0 %324
        %326 = vrot.lane.b32.xlu0 %v281, 109
        %v327 = vpop.permute.xlu0 %326
        %vm328 = vcmp.lt.s32.totalorder %v291, 109
        %v329 = vsel %vm328, %v325, %v327
        %v330 = vsel %vm328, %v323, %v325
        %v331 = vsel %vm328, %v321, %v323
        %332 = vrot.lane.b32.xlu0 %v278, 108
        %v333 = vpop.permute.xlu0 %332
        %334 = vrot.lane.b32.xlu0 %v279, 108
        %v335 = vpop.permute.xlu0 %334
        %336 = vrot.lane.b32.xlu0 %v280, 108
        %v337 = vpop.permute.xlu0 %336
        %338 = vrot.lane.b32.xlu0 %v281, 108
        %v339 = vpop.permute.xlu0 %338
        %vm340 = vcmp.lt.s32.totalorder %v291, 108
        %v341 = vsel %vm340, %v337, %v339
        %v342 = vsel %vm340, %v335, %v337
        %v343 = vsel %vm340, %v333, %v335
        %344 = vrot.lane.b32.xlu0 %v278, 92
        %v345 = vpop.permute.xlu0 %344
        %346 = vrot.lane.b32.xlu0 %v279, 92
        %v347 = vpop.permute.xlu0 %346
        %348 = vrot.lane.b32.xlu0 %v280, 92
        %v349 = vpop.permute.xlu0 %348
        %350 = vrot.lane.b32.xlu0 %v281, 92
        %v351 = vpop.permute.xlu0 %350
        %vm352 = vcmp.lt.s32.totalorder %v291, 92
        %v353 = vsel %vm352, %v349, %v351
        %v354 = vsel %vm352, %v347, %v349
        %v355 = vsel %vm352, %v345, %v347
        %356 = vrot.lane.b32.xlu0 %v278, 91
        %v357 = vpop.permute.xlu0 %356
        %358 = vrot.lane.b32.xlu0 %v279, 91
        %v359 = vpop.permute.xlu0 %358
        %360 = vrot.lane.b32.xlu0 %v280, 91
        %v361 = vpop.permute.xlu0 %360
        %362 = vrot.lane.b32.xlu0 %v281, 91
        %v363 = vpop.permute.xlu0 %362
        %vm364 = vcmp.lt.s32.totalorder %v291, 91
        %v365 = vsel %vm364, %v361, %v363
        %v366 = vsel %vm364, %v359, %v361
        %v367 = vsel %vm364, %v357, %v359
        %368 = vrot.lane.b32.xlu0 %v278, 90
        %v369 = vpop.permute.xlu0 %368
        %370 = vrot.lane.b32.xlu0 %v279, 90
        %v371 = vpop.permute.xlu0 %370
        %372 = vrot.lane.b32.xlu0 %v280, 90
        %v373 = vpop.permute.xlu0 %372
        %374 = vrot.lane.b32.xlu0 %v281, 90
        %v375 = vpop.permute.xlu0 %374
        %vm376 = vcmp.lt.s32.totalorder %v291, 90
        %v377 = vsel %vm376, %v373, %v375
        %v378 = vsel %vm376, %v371, %v373
        %v379 = vsel %vm376, %v369, %v371
        %v380 = vld [vmem:[#allocation7] sm:$0xff]
        %vm381 = vcmask 588800
        %v383 = vsel %vm381, %v380, 0
        %385 = vmatprep.subr.mxu0 %v279
        %386 = vmatpush1.msra.mxu0 %v278
        %387 = vmatprep.subr.mxu0 %v294
        %388 = vmatpush1.msra.mxu0 %v295
        %389 = vmatprep.subr.mxu0 %v306
        %390 = vmatpush1.msra.mxu0 %v307
        %391 = vmatprep.subr.mxu0 %v318
        %392 = vmatpush1.msra.mxu0 %v319
        %393 = vmatprep.subr.mxu0 %v330
        %394 = vmatpush1.msra.mxu0 %v331
        %395 = vmatprep.subr.mxu0 %v342
        %396 = vmatpush1.msra.mxu0 %v343
        %397 = vmatprep.subr.mxu0 %v354
        %398 = vmatpush1.msra.mxu0 %v355
        %399 = vmatprep.subr.mxu0 %v366
        %400 = vmatpush1.msra.mxu0 %v367
        %401 = vmatprep.subr.mxu0 %v378
        %402 = vmatpush1.msra.mxu0 %v379
        %403 = vmatprep.subr.mxu0 0.0
        %404 = vmatpush1.msra.mxu0 0.0
        %405 = vmatprep.subr.mxu0 0.0
        %406 = vmatpush1.msra.mxu0 0.0
        %407 = vmatprep.subr.mxu0 0.0
        %408 = vmatpush1.msra.mxu0 0.0
        %409 = vmatprep.subr.mxu0 0.0
        %410 = vmatpush1.msra.mxu0 0.0
        %411 = vmatprep.subr.mxu0 0.0
        %412 = vmatpush1.msra.mxu0 0.0
        %413 = vmatprep.subr.mxu0 0.0
        %414 = vmatpush1.msra.mxu0 0.0
        %415 = vmatprep.subr.mxu0 0.0
        %416 = vmatpush1.msra.mxu0 0.0
        %417 = vmatprep.subr.mxu0 0.0
        %418 = vmatpush1.msra.mxu0 0.0
        %419 = vmatprep.subr.mxu0 0.0
        %420 = vmatpush1.msra.mxu0 0.0
        %421 = vmatprep.subr.mxu0 0.0
        %422 = vmatpush1.msra.mxu0 0.0
        %423 = vmatprep.subr.mxu0 0.0
        %424 = vmatpush1.msra.mxu0 0.0
        %425 = vmatprep.subr.mxu0 0.0
        %426 = vmatpush1.msra.mxu0 0.0
        %427 = vmatprep.subr.mxu0 0.0
        %428 = vmatpush1.msra.mxu0 0.0
        %429 = vmatprep.subr.mxu0 0.0
        %430 = vmatpush1.msra.mxu0 0.0
        %431 = vmatprep.subr.mxu0 0.0
        %432 = vmatpush1.msra.mxu0 0.0
        %433 = vmatprep.subr.mxu0 0.0
        %434 = vmatpush1.msra.mxu0 0.0
        %435 = vmatprep.subr.mxu0 0.0
        %436 = vmatpush1.msra.mxu0 0.0
        %437 = vmatprep.subr.mxu0 0.0
        %438 = vmatpush1.msra.mxu0 0.0
        %439 = vmatprep.subr.mxu0 0.0
        %440 = vmatpush1.msra.mxu0 0.0
        %441 = vmatprep.subr.mxu0 0.0
        %442 = vmatpush1.msra.mxu0 0.0
        %443 = vmatprep.subr.mxu0 0.0
        %444 = vmatpush1.msra.mxu0 0.0
        %445 = vmatprep.subr.mxu0 0.0
        %446 = vmatpush1.msra.mxu0 0.0
        %447 = vmatprep.subr.mxu0 0.0
        %448 = vmatpush1.msra.mxu0 0.0
        %449 = vmatprep.mubr.f32.mxu0 0.0
        %450 = vmatmul.mubr.f32.gmra.mrb[0].mxu0 %v383
        %v451 = vpop.f32.mrb[0].mxu0
        %v452 = vadd.f32 0.0, %v451
        %v453 = vpop.f32.mrb[0].mxu0
        %v454 = vadd.f32 0.0, %v453
        %455 = vdwg.mxu0
        %456 = vmatprep.subr.mxu0 0.0
        %457 = vmatpush1.msra.mxu0 %v280
        %458 = vmatprep.subr.mxu0 0.0
        %459 = vmatpush1.msra.mxu0 %v293
        %460 = vmatprep.subr.mxu0 0.0
        %461 = vmatpush1.msra.mxu0 %v305
        %462 = vmatprep.subr.mxu0 0.0
        %463 = vmatpush1.msra.mxu0 %v317
        %464 = vmatprep.subr.mxu0 0.0
        %465 = vmatpush1.msra.mxu0 %v329
        %466 = vmatprep.subr.mxu0 0.0
        %467 = vmatpush1.msra.mxu0 %v341
        %468 = vmatprep.subr.mxu0 0.0
        %469 = vmatpush1.msra.mxu0 %v353
        %470 = vmatprep.subr.mxu0 0.0
        %471 = vmatpush1.msra.mxu0 %v365
        %472 = vmatprep.subr.mxu0 0.0
        %473 = vmatpush1.msra.mxu0 %v377
        %474 = vmatprep.subr.mxu0 0.0
        %475 = vmatpush1.msra.mxu0 0.0
        %476 = vmatprep.subr.mxu0 0.0
        %477 = vmatpush1.msra.mxu0 0.0
        %478 = vmatprep.subr.mxu0 0.0
        %479 = vmatpush1.msra.mxu0 0.0
        %480 = vmatprep.subr.mxu0 0.0
        %481 = vmatpush1.msra.mxu0 0.0
        %482 = vmatprep.subr.mxu0 0.0
        %483 = vmatpush1.msra.mxu0 0.0
        %484 = vmatprep.subr.mxu0 0.0
        %485 = vmatpush1.msra.mxu0 0.0
        %486 = vmatprep.subr.mxu0 0.0
        %487 = vmatpush1.msra.mxu0 0.0
        %488 = vmatprep.subr.mxu0 0.0
        %489 = vmatpush1.msra.mxu0 0.0
        %490 = vmatprep.subr.mxu0 0.0
        %491 = vmatpush1.msra.mxu0 0.0
        %492 = vmatprep.subr.mxu0 0.0
        %493 = vmatpush1.msra.mxu0 0.0
        %494 = vmatprep.subr.mxu0 0.0
        %495 = vmatpush1.msra.mxu0 0.0
        %496 = vmatprep.subr.mxu0 0.0
        %497 = vmatpush1.msra.mxu0 0.0
        %498 = vmatprep.subr.mxu0 0.0
        %499 = vmatpush1.msra.mxu0 0.0
        %500 = vmatprep.subr.mxu0 0.0
        %501 = vmatpush1.msra.mxu0 0.0
        %502 = vmatprep.subr.mxu0 0.0
        %503 = vmatpush1.msra.mxu0 0.0
        %504 = vmatprep.subr.mxu0 0.0
        %505 = vmatpush1.msra.mxu0 0.0
        %506 = vmatprep.subr.mxu0 0.0
        %507 = vmatpush1.msra.mxu0 0.0
        %508 = vmatprep.subr.mxu0 0.0
        %509 = vmatpush1.msra.mxu0 0.0
        %510 = vmatprep.subr.mxu0 0.0
        %511 = vmatpush1.msra.mxu0 0.0
        %512 = vmatprep.subr.mxu0 0.0
        %513 = vmatpush1.msra.mxu0 0.0
        %514 = vmatprep.subr.mxu0 0.0
        %515 = vmatpush1.msra.mxu0 0.0
        %516 = vmatprep.subr.mxu0 0.0
        %517 = vmatpush1.msra.mxu0 0.0
        %518 = vmatprep.subr.mxu0 0.0
        %519 = vmatpush1.msra.mxu0 0.0
        %520 = vmatprep.mubr.f32.mxu0 0.0
        %521 = vmatmul.mubr.f32.gmra.mrb[0].mxu0 %v383
        %v522 = vpop.f32.mrb[0].mxu0
        %v523 = vadd.f32 0.0, %v522
        %v524 = vpop.f32.mrb[0].mxu0
        %525 = vdwg.mxu0
        %v526 = vmax.f32 %v452, 0.0
        %v527 = vmax.f32 %v454, 0.0
        %v528 = vmax.f32 %v523, 0.0
        %529 = vst [vmem:[%s269] sm:$0xff] %v526
        %530 = vst [vmem:[%s269 + $0x8] sm:$0xff] %v527
        %531 = vst [vmem:[%s269 + $0x10] sm:$0xff] %v528
        %s532 = sand.u32 %s126, 1
        %s533 = scalar_lea.sflag [#allocation4], %s532
        %s534 = sand.u32 %s126, 1
        %s535 = smul.addr %s534, 24
        %s536 = scalar_lea.vmem [#allocation8], %s535
        // Predicated region
        $region45: #{tpu_custom_call.1} parent=31 // pred_check
          %p537 = pneg %p136
        $region46: #{tpu_custom_call.1} parent=31 // pred_check_branch
          %539 = sbr.rel (%p537) target = $region48
        $region47: #{tpu_custom_call.1} parent=31 // pred_region
          %s540 = smul.u32 3, %s28
          %s542 = ssub.s32 384, 384
          %543 = vsyncadd %s533, %s542
          %s544 = smul.addr %s27, 3
          %s545 = sadd.s32 %s540, %s544
          %s546 = smul.addr %s545, 128
          %s547 = scalar_lea.hbm %s3, %s546
          %s549 = sshll.u32 %s536, 4
          %s550 = int_to_ptr.vmem [resolvable:$true] %s549
          %552 = dma.vmem_to_hbm [thread:$0]  %s550, 384, %s547, %s533
        $region48: #{tpu_custom_call.1} parent=31 // pred_fallthru
          _
      $region32: #{tpu_custom_call.1} parent=5 // pred_fallthru
        _
      %p553 = scmp.le.s32.totalorder 2, %s18
      // Predicated region
      $region49: #{tpu_custom_call.1} parent=5 // pred_check
        %p554 = pneg %p553
      $region50: #{tpu_custom_call.1} parent=5 // pred_check_branch
        %556 = sbr.rel (%p554) target = $region52
      $region51: #{tpu_custom_call.1} parent=5 // pred_region
        %s557 = ssub.s32 %s18, 2
        // Predicated region
        $region53: #{tpu_custom_call.1} parent=51 // pred_check
          %p558 = pneg %p142
        $region54: #{tpu_custom_call.1} parent=51 // pred_check_branch
          %560 = sbr.rel (%p558) target = $region56
        $region55: #{tpu_custom_call.1} parent=51 // pred_region
          %s561 = sand.u32 %s127, 1
          %s562 = scalar_lea.sflag [#allocation4], %s561
          %s563 = sand.u32 %s127, 1
          %s564 = smul.addr %s563, 24
          %s565 = scalar_lea.vmem [#allocation8], %s564
          %566 = dma.done %s562, 384
        $region56: #{tpu_custom_call.1} parent=51 // pred_fallthru
          _
      $region52: #{tpu_custom_call.1} parent=5 // pred_fallthru
        _
    $region6: #{tpu_custom_call.1} parent=1 // loop_footer
      %s22 = sadd.s32 1, %s18
    $region7: #{tpu_custom_call.1} parent=1 // loop_footer_branch
      %17 = sbr.rel target = $region3
    $region8: #{tpu_custom_call.1} parent=1 // loop_exit
      _
    %567 = vsyncpa [#allocation3], 1
    %s568 = scalar_lea.sflag [#allocation3], 1
    %569 = vsyncpa %s568, 1
    %570 = vsyncpa [#allocation6], 1
    %s571 = scalar_lea.sflag [#allocation6], 1
    %572 = vsyncpa %s571, 1
    %573 = vsyncpa [#allocation4], 1
    %s574 = scalar_lea.sflag [#allocation4], 1
    %575 = vsyncpa %s574, 1

</llo_original>
